<compile_context>
chip_gen: v7x
topology: tpu7x:2x2x1
jax: 0.10.0
libtpu: 0.0.40
codegen_flags: <defaults>
</compile_context>

<pallas_src>
import jax
import jax.numpy as jnp
from jax.experimental import pallas as pl
from jax.experimental.pallas import tpu as pltpu


def _round_up(x, m):
    return (x + m - 1) // m * m


def _pad2d(a, rows, cols):
    r, c = a.shape
    if r == rows and c == cols:
        return a
    return jnp.pad(a, ((0, rows - r), (0, cols - c)))


def _lora_linear_kernel(x_ref, wt_ref, b_ref, xa_ref, bb_ref, o_ref, acc_ref):
    # x_ref:  [tm, tk]      bf16  current M/K tile of the activations
    # wt_ref: [tk, tn]      bf16  current K/N tile of W^T (pre-transposed, frozen)
    # b_ref:  [1, tn]       f32   bias tile (lane-aligned broadcast row)
    # xa_ref: [tm, rank_p]  bf16  precomputed x @ A tile (k-invariant)
    # bb_ref: [rank_p, tn]  bf16  LoRA (alpha * B) tile
    # o_ref:  [tm, tn]      bf16  output tile
    # acc_ref:[tm, tn]      f32   accumulator scratch (persists across k)
    k = pl.program_id(2)
    nk = pl.num_programs(2)

    @pl.when(k == 0)
    def _():
        # Fold the bias into the accumulator init (free vs. an epilogue add).
        acc_ref[...] = jnp.broadcast_to(b_ref[...], acc_ref.shape)

    # Frozen linear path: accumulate x_tile @ (W^T)_tile over k on the MXU.
    acc_ref[...] += jnp.dot(x_ref[...], wt_ref[...],
                            preferred_element_type=jnp.float32)

    # Epilogue once per output tile: low-rank expansion + single store.
    @pl.when(k == nk - 1)
    def _():
        lora = jnp.dot(xa_ref[...], bb_ref[...],
                       preferred_element_type=jnp.float32)
        o_ref[...] = (acc_ref[...] + lora).astype(o_ref.dtype)


def prepare_lora_params(W, b, A, B, alpha, *, tn=512, tk=1024):
    """One-time prep of the frozen parameters (do NOT call per forward).

    W: [out_dim, in_dim] (PyTorch nn.Linear layout), b: [out_dim],
    A: [in_dim, rank], B: [rank, out_dim], alpha: python scalar.
    Transposes W, folds alpha into B, casts to bf16, zero-pads to tile
    multiples (rank padded to 128 for lane-dense vregs).
    """
    out_dim, in_dim = W.shape
    rank = A.shape[1]

    tn = min(tn, _round_up(out_dim, 128))
    tk = min(tk, _round_up(in_dim, 128))
    Np = _round_up(out_dim, tn)
    Kp = _round_up(in_dim, tk)
    rank_p = _round_up(rank, 128)

    Wt = _pad2d(W.T, Kp, Np).astype(jnp.bfloat16)                    # [Kp, Np]
    b2 = _pad2d(b.reshape(1, out_dim).astype(jnp.float32), 1, Np)    # [1, Np]  f32
    A_p = _pad2d(A, Kp, rank_p).astype(jnp.bfloat16)                 # [Kp, rank_p]
    B_p = _pad2d(jnp.asarray(alpha, jnp.float32) * B.astype(jnp.float32),
                 rank_p, Np).astype(jnp.bfloat16)                    # alpha folded

    return dict(Wt=Wt, b2=b2, A=A_p, B=B_p,
                in_dim=in_dim, out_dim=out_dim,
                Kp=Kp, Np=Np, rank_p=rank_p, tn=tn, tk=tk)


def linear_with_lora(x, params, *, tm=512):
    """x: [..., in_dim] -> [..., out_dim] (bf16) via the fused Pallas kernel."""
    in_dim, out_dim = params["in_dim"], params["out_dim"]
    Kp, Np, rank_p = params["Kp"], params["Np"], params["rank_p"]
    tn, tk = params["tn"], params["tk"]

    lead = x.shape[:-1]
    M = 1
    for d in lead:
        M *= d
    x2 = x.reshape(M, in_dim).astype(jnp.bfloat16)

    tm = min(tm, _round_up(M, 8))
    Mp = _round_up(M, tm)
    x_p = _pad2d(x2, Mp, Kp)  # no-op when already aligned

    # Hoisted LoRA first GEMM (tiny: 2*M*K*rank FLOPs), f32 accumulate then
    # round to the MXU-native bf16 input for the in-kernel expansion.
    xa = jnp.dot(x_p, params["A"],
                 preferred_element_type=jnp.float32).astype(jnp.bfloat16)

    grid = (Mp // tm, Np // tn, Kp // tk)

    out = pl.pallas_call(
        _lora_linear_kernel,
        out_shape=jax.ShapeDtypeStruct((Mp, Np), jnp.bfloat16),
        grid_spec=pltpu.PrefetchScalarGridSpec(
            num_scalar_prefetch=0,
            grid=grid,
            in_specs=[
                pl.BlockSpec((tm, tk), lambda i, j, k: (i, k)),        # x
                pl.BlockSpec((tk, tn), lambda i, j, k: (k, j)),        # W^T
                pl.BlockSpec((1, tn), lambda i, j, k: (0, j)),         # bias (f32)
                pl.BlockSpec((tm, rank_p), lambda i, j, k: (i, 0)),    # x @ A
                pl.BlockSpec((rank_p, tn), lambda i, j, k: (0, j)),    # alpha*B
            ],
            out_specs=pl.BlockSpec((tm, tn), lambda i, j, k: (i, j)),
            scratch_shapes=[
                pltpu.VMEM((tm, tn), jnp.float32),  # f32 accumulator
            ],
        ),
        compiler_params=pltpu.CompilerParams(
            # xa is precomputed -> i AND j are independent (v7x megacore can
            # shard either); only k carries the accumulator.
            dimension_semantics=("parallel", "parallel", "arbitrary"),
            # Raise v5e's 16 MiB scoped default; stays within v7x's 32 MiB
            # scoped / 64 MiB physical budget.
            vmem_limit_bytes=32 * 1024 * 1024),
    )(x_p, params["Wt"], params["b2"], xa, params["B"])

    if Mp != M or Np != out_dim:
        out = out[:M, :out_dim]
    return out.reshape(*lead, out_dim)


if __name__ == "__main__":
    # Shapes implied by the module: Linear(in=32, out=32), rank=4, alpha=2.
    batch, seq, in_dim, out_dim, rank = 2, 8, 32, 32, 4
    alpha = 2.0

    key = jax.random.PRNGKey(0)
    kx, kw, kb, ka, kB = jax.random.split(key, 5)

    x = jax.random.normal(kx, (batch, seq, in_dim), dtype=jnp.float32)
    W = jax.random.normal(kw, (out_dim, in_dim), dtype=jnp.float32) * 0.1
    bias = jax.random.normal(kb, (out_dim,), dtype=jnp.float32) * 0.1
    # LoRALayer init: A ~ N(0,1)/sqrt(rank), B = zeros (adapter contributes 0).
    # Use a small random B so the LoRA branch is numerically exercised.
    A = jax.random.normal(ka, (in_dim, rank), dtype=jnp.float32) / jnp.sqrt(float(rank))
    B = jax.random.normal(kB, (rank, out_dim), dtype=jnp.float32) * 0.05

    params = prepare_lora_params(W, bias, A, B, alpha)
    out = linear_with_lora(x, params)
    out = jax.block_until_ready(out)

    # Reference on the same bf16-rounded operands the kernel consumes
    # (f32 math), to isolate kernel correctness from bf16 quantization.
    xb = x.astype(jnp.bfloat16).astype(jnp.float32)
    Wb = W.astype(jnp.bfloat16).astype(jnp.float32)
    Ab = A.astype(jnp.bfloat16).astype(jnp.float32)
    Bb = B.astype(jnp.bfloat16).astype(jnp.float32)
    ref = xb @ Wb.T + bias + alpha * ((xb @ Ab) @ Bb)

    assert out.shape == (batch, seq, out_dim)
    assert out.dtype == jnp.bfloat16
    assert jnp.allclose(out.astype(jnp.float32), ref, atol=5e-2, rtol=5e-2), \
        "mismatch vs reference"

    print("KERNEL_OK")
</pallas_src>

<mosaic_0001>
module attributes {stable_mosaic.version = 11 : i64} {
  func.func @_lora_linear_kernel(%arg0: i32, %arg1: i32, %arg2: i32, %arg3: memref<16x128xbf16, #tpu.memory_space<vmem>>, %arg4: memref<128x128xbf16, #tpu.memory_space<vmem>>, %arg5: memref<1x128xf32, #tpu.memory_space<vmem>>, %arg6: memref<16x128xbf16, #tpu.memory_space<vmem>>, %arg7: memref<128x128xbf16, #tpu.memory_space<vmem>>, %arg8: memref<16x128xbf16, #tpu.memory_space<vmem>>, %arg9: memref<16x128xf32, #tpu.memory_space<vmem>>) attributes {dimension_semantics = [#tpu.dimension_semantics<parallel>, #tpu.dimension_semantics<parallel>, #tpu.dimension_semantics<arbitrary>], iteration_bounds = array<i64: 1, 1, 1>, scalar_prefetch = 0 : i64, scratch_operands = 1 : i64, tpu.core_type = #tpu.core_type<tc>, window_params = [{transform_indices = @transform_0, window_bounds = array<i64: 16, 128>}, {transform_indices = @transform_1, window_bounds = array<i64: 128, 128>}, {transform_indices = @transform_2, window_bounds = array<i64: 1, 128>}, {transform_indices = @transform_3, window_bounds = array<i64: 16, 128>}, {transform_indices = @transform_4, window_bounds = array<i64: 128, 128>}, {transform_indices = @transform_5, window_bounds = array<i64: 16, 128>}]} {
    %c0_i32 = arith.constant 0 : i32
    %0 = arith.cmpi eq, %arg2, %c0_i32 : i32
    %1 = arith.extui %0 : i1 to i32
    %c0_i32_0 = arith.constant 0 : i32
    %2 = arith.cmpi ne, %1, %c0_i32_0 : i32
    scf.if %2 {
      %c0_10 = arith.constant 0 : index
      %c0_11 = arith.constant 0 : index
      %12 = vector.load %arg5[%c0_10, %c0_11] : memref<1x128xf32, #tpu.memory_space<vmem>>, vector<1x128xf32>
      %13 = vector.shape_cast %12 : vector<1x128xf32> to vector<1x128xf32>
      %14 = vector.broadcast %13 : vector<1x128xf32> to vector<16x128xf32>
      %c0_12 = arith.constant 0 : index
      %c0_13 = arith.constant 0 : index
      %15 = vector.load %arg9[%c0_12, %c0_13] : memref<16x128xf32, #tpu.memory_space<vmem>>, vector<16x128xf32>
      tpu.vector_store %arg9[%c0_12, %c0_13], %14 {strides = array<i32>} : memref<16x128xf32, #tpu.memory_space<vmem>>, vector<16x128xf32>,
    } else {
    }
    %c0 = arith.constant 0 : index
    %c0_1 = arith.constant 0 : index
    %3 = vector.load %arg9[%c0, %c0_1] : memref<16x128xf32, #tpu.memory_space<vmem>>, vector<16x128xf32>
    %c0_2 = arith.constant 0 : index
    %c0_3 = arith.constant 0 : index
    %4 = vector.load %arg3[%c0_2, %c0_3] : memref<16x128xbf16, #tpu.memory_space<vmem>>, vector<16x128xbf16>
    %c0_4 = arith.constant 0 : index
    %c0_5 = arith.constant 0 : index
    %5 = vector.load %arg4[%c0_4, %c0_5] : memref<128x128xbf16, #tpu.memory_space<vmem>>, vector<128x128xbf16>
    %cst = arith.constant dense<0.000000e+00> : vector<16x128xf32>
    %6 = tpu.matmul %4, %5, %cst {dimension_numbers = #tpu.dot_dimension_numbers<[1], [0], [0], [1], [0, 0, 1, 1], [], []>} : vector<16x128xbf16>, vector<128x128xbf16>, vector<16x128xf32> -> vector<16x128xf32>
    %7 = arith.addf %3, %6 : vector<16x128xf32>
    %c0_6 = arith.constant 0 : index
    %c0_7 = arith.constant 0 : index
    %8 = vector.load %arg9[%c0_6, %c0_7] : memref<16x128xf32, #tpu.memory_space<vmem>>, vector<16x128xf32>
    tpu.vector_store %arg9[%c0_6, %c0_7], %7 {strides = array<i32>} : memref<16x128xf32, #tpu.memory_space<vmem>>, vector<16x128xf32>,
    %c0_i32_8 = arith.constant 0 : i32
    %9 = arith.cmpi eq, %arg2, %c0_i32_8 : i32
    %10 = arith.extui %9 : i1 to i32
    %c0_i32_9 = arith.constant 0 : i32
    %11 = arith.cmpi ne, %10, %c0_i32_9 : i32
    scf.if %11 {
      %c0_10 = arith.constant 0 : index
      %c0_11 = arith.constant 0 : index
      %12 = vector.load %arg6[%c0_10, %c0_11] : memref<16x128xbf16, #tpu.memory_space<vmem>>, vector<16x128xbf16>
      %c0_12 = arith.constant 0 : index
      %c0_13 = arith.constant 0 : index
      %13 = vector.load %arg7[%c0_12, %c0_13] : memref<128x128xbf16, #tpu.memory_space<vmem>>, vector<128x128xbf16>
      %cst_14 = arith.constant dense<0.000000e+00> : vector<16x128xf32>
      %14 = tpu.matmul %12, %13, %cst_14 {dimension_numbers = #tpu.dot_dimension_numbers<[1], [0], [0], [1], [0, 0, 1, 1], [], []>} : vector<16x128xbf16>, vector<128x128xbf16>, vector<16x128xf32> -> vector<16x128xf32>
      %c0_15 = arith.constant 0 : index
      %c0_16 = arith.constant 0 : index
      %15 = vector.load %arg9[%c0_15, %c0_16] : memref<16x128xf32, #tpu.memory_space<vmem>>, vector<16x128xf32>
      %16 = arith.addf %15, %14 : vector<16x128xf32>
      %17 = arith.truncf %16 : vector<16x128xf32> to vector<16x128xbf16>
      %c0_17 = arith.constant 0 : index
      %c0_18 = arith.constant 0 : index
      %18 = vector.load %arg8[%c0_17, %c0_18] : memref<16x128xbf16, #tpu.memory_space<vmem>>, vector<16x128xbf16>
      tpu.vector_store %arg8[%c0_17, %c0_18], %17 {strides = array<i32>} : memref<16x128xbf16, #tpu.memory_space<vmem>>, vector<16x128xbf16>,
    } else {
    }
    return
  }
  func.func @transform_0(%arg0: i32, %arg1: i32, %arg2: i32) -> (i32, i32) {
    %c0_i32 = arith.constant 0 : i32
    return %arg0, %arg2 : i32, i32
  }
  func.func @transform_1(%arg0: i32, %arg1: i32, %arg2: i32) -> (i32, i32) {
    %c0_i32 = arith.constant 0 : i32
    return %arg2, %arg1 : i32, i32
  }
  func.func @transform_2(%arg0: i32, %arg1: i32, %arg2: i32) -> (i32, i32) {
    %c0_i32 = arith.constant 0 : i32
    %c0_i32_0 = arith.constant 0 : i32
    return %c0_i32, %arg1 : i32, i32
  }
  func.func @transform_3(%arg0: i32, %arg1: i32, %arg2: i32) -> (i32, i32) {
    %c0_i32 = arith.constant 0 : i32
    %c0_i32_0 = arith.constant 0 : i32
    return %arg0, %c0_i32 : i32, i32
  }
  func.func @transform_4(%arg0: i32, %arg1: i32, %arg2: i32) -> (i32, i32) {
    %c0_i32 = arith.constant 0 : i32
    %c0_i32_0 = arith.constant 0 : i32
    return %c0_i32, %arg1 : i32, i32
  }
  func.func @transform_5(%arg0: i32, %arg1: i32, %arg2: i32) -> (i32, i32) {
    %c0_i32 = arith.constant 0 : i32
    return %arg0, %arg1 : i32, i32
  }
}

</mosaic_0001>

<llo_original>
// kernel: tpu_custom_call.1
$region0: #{tpu_custom_call.1}
  #allocation0 [shape = 'u32[]', space=smem, size = 0x4, offset = 0x4, fixed_abs, tag = 'smem constant byte address 0x4 - core index']
  #allocation1 [shape = 'u32[144,128]{1,0:T(1,128)}', space=vmem, size = 0x12000, scoped, tag = 'internal scratch']
  #allocation2 [shape = 'f32[16,128]{1,0:T(8,128)}', space=vmem, size = 0x2000, scoped, tag = 'scratch operand']
  %s0 = inlined_call_operand.hbm [shape: bf16[16,128], index: 0, kind: input, shape index: {}]
  %s1 = inlined_call_operand.hbm [shape: bf16[128,128], index: 1, kind: input, shape index: {}]
  %s2 = inlined_call_operand.vmem [shape: f32[1,128], index: 2, kind: input, shape index: {}]
  %s3 = inlined_call_operand.vmem [shape: bf16[16,128], index: 3, kind: input, shape index: {}]
  %s4 = inlined_call_operand.hbm [shape: bf16[128,128], index: 4, kind: input, shape index: {}]
  %s5 = inlined_call_operand.hbm [shape: bf16[16,128], index: 5, kind: output, shape index: {}]
  %s6 = sld [smem:[#allocation0]]
  $region50: #{tpu_custom_call.1} parent=0
    _
  %s8 = ssub.s32 1, %s6
  %s9 = scalar_select 0, %s8, %s6
  $region1: #{tpu_custom_call.1} parent=0
    #allocation3 [shape = 'u8[4096]{0}', space=vmem, size = 0x1000, scoped, tag = 'input window, operand 0, single buffered']
    #allocation4 [shape = 's32[1]{0}', space=sflag, size = 0x4, scoped, tag = 'scoped memory for tpu_custom_call.1']
    #allocation5 [shape = 's32[1]{0}', space=sflag, size = 0x4, scoped, tag = 'scoped memory for tpu_custom_call.1']
    #allocation6 [shape = 'u8[32768]{0}', space=vmem, size = 0x8000, scoped, tag = 'input window, operand 1, single buffered']
    #allocation7 [shape = 's32[1]{0}', space=sflag, size = 0x4, scoped, tag = 'scoped memory for tpu_custom_call.1']
    #allocation8 [shape = 'u8[32768]{0}', space=vmem, size = 0x8000, scoped, tag = 'input window, operand 4, single buffered']
    #allocation9 [shape = 'u8[4096]{0}', space=vmem, size = 0x1000, scoped, tag = 'output window, operand 0, single buffered']
    %10 = vsyncpa [#allocation4], 0
    %11 = vsyncpa [#allocation7], 0
    %12 = vsyncpa [#allocation5], 0
    // Predicated region
    $region2: #{tpu_custom_call.1} parent=1 // pred_check
      _
    $region3: #{tpu_custom_call.1} parent=1 // pred_check_branch
      %14 = sbr.rel (0) target = $region5
    $region4: #{tpu_custom_call.1} parent=1 // pred_region
      %s16 = ssub.s32 128, 128
      %17 = vsyncadd [#allocation4], %s16
      %s18 = sshll.u32 [#allocation3], 4
      %s19 = int_to_ptr.vmem [resolvable:$true] %s18
      %24 = dma.hbm_to_vmem [thread:$0]  %s0, 128, %s19, [#allocation4], 64, 64, 4
    $region5: #{tpu_custom_call.1} parent=1 // pred_fallthru
      _
    // Predicated region
    $region6: #{tpu_custom_call.1} parent=1 // pred_check
      _
    $region7: #{tpu_custom_call.1} parent=1 // pred_check_branch
      %26 = sbr.rel (0) target = $region9
    $region8: #{tpu_custom_call.1} parent=1 // pred_region
      %s28 = ssub.s32 1024, 1024
      %29 = vsyncadd [#allocation7], %s28
      %s30 = sshll.u32 [#allocation6], 4
      %s31 = int_to_ptr.vmem [resolvable:$true] %s30
      %36 = dma.hbm_to_vmem [thread:$0]  %s1, 1024, %s31, [#allocation7], 64, 64, 4
    $region9: #{tpu_custom_call.1} parent=1 // pred_fallthru
      _
    // Predicated region
    $region10: #{tpu_custom_call.1} parent=1 // pred_check
      _
    $region11: #{tpu_custom_call.1} parent=1 // pred_check_branch
      %38 = sbr.rel (0) target = $region13
    $region12: #{tpu_custom_call.1} parent=1 // pred_region
      _
    $region13: #{tpu_custom_call.1} parent=1 // pred_fallthru
      _
    // Predicated region
    $region14: #{tpu_custom_call.1} parent=1 // pred_check
      _
    $region15: #{tpu_custom_call.1} parent=1 // pred_check_branch
      %40 = sbr.rel (0) target = $region17
    $region16: #{tpu_custom_call.1} parent=1 // pred_region
      _
    $region17: #{tpu_custom_call.1} parent=1 // pred_fallthru
      _
    // Predicated region
    $region18: #{tpu_custom_call.1} parent=1 // pred_check
      _
    $region19: #{tpu_custom_call.1} parent=1 // pred_check_branch
      %42 = sbr.rel (0) target = $region21
    $region20: #{tpu_custom_call.1} parent=1 // pred_region
      %s44 = ssub.s32 1024, 1024
      %45 = vsyncadd [#allocation7], %s44
      %s46 = sshll.u32 [#allocation8], 4
      %s47 = int_to_ptr.vmem [resolvable:$true] %s46
      %52 = dma.hbm_to_vmem [thread:$0]  %s4, 1024, %s47, [#allocation7], 64, 64, 4
    $region21: #{tpu_custom_call.1} parent=1 // pred_fallthru
      _
    // Predicated region
    $region22: #{tpu_custom_call.1} parent=1 // pred_check
      _
    $region23: #{tpu_custom_call.1} parent=1 // pred_check_branch
      %54 = sbr.rel (0) target = $region25
    $region24: #{tpu_custom_call.1} parent=1 // pred_region
      %55 = dma.done [#allocation4], 128
    $region25: #{tpu_custom_call.1} parent=1 // pred_fallthru
      _
    // Predicated region
    $region26: #{tpu_custom_call.1} parent=1 // pred_check
      _
    $region27: #{tpu_custom_call.1} parent=1 // pred_check_branch
      %57 = sbr.rel (0) target = $region29
    $region28: #{tpu_custom_call.1} parent=1 // pred_region
      %58 = dma.done [#allocation7], 1024
    $region29: #{tpu_custom_call.1} parent=1 // pred_fallthru
      _
    // Predicated region
    $region30: #{tpu_custom_call.1} parent=1 // pred_check
      _
    $region31: #{tpu_custom_call.1} parent=1 // pred_check_branch
      %60 = sbr.rel (0) target = $region33
    $region32: #{tpu_custom_call.1} parent=1 // pred_region
      %61 = dma.done [#allocation7], 1024
    $region33: #{tpu_custom_call.1} parent=1 // pred_fallthru
      _
    %p63 = scmp.eq.s32.totalorder 0, 0
    // Predicated region
    $region34: #{tpu_custom_call.1} parent=1 // pred_check
      %p64 = pneg %p63
    $region35: #{tpu_custom_call.1} parent=1 // pred_check_branch
      %66 = sbr.rel (%p64) target = $region37
    $region36: #{tpu_custom_call.1} parent=1 // pred_region
      %v67 = vld [vmem:[%s2] sm:$0x1]
      %v69 = vlaneseq
      %v70 = vshrl.u32 %v69, 7
      %v71 = vsub.s32 0, %v70
      %v72 = vrot.slane %v67, %v71
      %74 = vst [vmem:[#allocation2] sm:$0xff] %v72
      %75 = vst [vmem:[#allocation2 + $0x8] sm:$0xff] %v72
    $region37: #{tpu_custom_call.1} parent=1 // pred_fallthru
      _
    %v76 = vld [vmem:[#allocation2] sm:$0xff]
    %v77 = vld [vmem:[#allocation2 + $0x8] sm:$0xff]
    %v78 = vld [vmem:[#allocation3] sm:$0xf]
    %v79 = vld [vmem:[#allocation3 + $0x4] sm:$0xf]
    %v80 = vld [vmem:[#allocation6] sm:$0xf]
    %v81 = vld [vmem:[#allocation6 + $0x4] sm:$0xf]
    %v82 = vld [vmem:[#allocation6 + $0x8] sm:$0xf]
    %v83 = vld [vmem:[#allocation6 + $0xc] sm:$0xf]
    %v84 = vld [vmem:[#allocation6 + $0x10] sm:$0xf]
    %v85 = vld [vmem:[#allocation6 + $0x14] sm:$0xf]
    %v86 = vld [vmem:[#allocation6 + $0x18] sm:$0xf]
    %v87 = vld [vmem:[#allocation6 + $0x1c] sm:$0xf]
    %v88 = vld [vmem:[#allocation6 + $0x20] sm:$0xf]
    %v89 = vld [vmem:[#allocation6 + $0x24] sm:$0xf]
    %v90 = vld [vmem:[#allocation6 + $0x28] sm:$0xf]
    %v91 = vld [vmem:[#allocation6 + $0x2c] sm:$0xf]
    %v92 = vld [vmem:[#allocation6 + $0x30] sm:$0xf]
    %v93 = vld [vmem:[#allocation6 + $0x34] sm:$0xf]
    %v94 = vld [vmem:[#allocation6 + $0x38] sm:$0xf]
    %v95 = vld [vmem:[#allocation6 + $0x3c] sm:$0xf]
    %v98 = vunpack.c.l.b16 %v78
    %v99 = vunpack.c.l.b16 %v79
    %v100 = vpack.c.b16 %v99, %v98
    %v118 = vunpack.c.l.b16 %v80
    %v119 = vunpack.c.l.b16 %v81
    %v120 = vunpack.c.l.b16 %v82
    %v121 = vunpack.c.l.b16 %v83
    %v122 = vunpack.c.l.b16 %v84
    %v123 = vunpack.c.l.b16 %v85
    %v124 = vunpack.c.l.b16 %v86
    %v125 = vunpack.c.l.b16 %v87
    %v126 = vunpack.c.l.b16 %v88
    %v127 = vunpack.c.l.b16 %v89
    %v128 = vunpack.c.l.b16 %v90
    %v129 = vunpack.c.l.b16 %v91
    %v130 = vunpack.c.l.b16 %v92
    %v131 = vunpack.c.l.b16 %v93
    %v132 = vunpack.c.l.b16 %v94
    %v133 = vunpack.c.l.b16 %v95
    %v134 = vpack.c.b16 %v119, %v118
    %v135 = vpack.c.b16 %v121, %v120
    %v136 = vpack.c.b16 %v123, %v122
    %v137 = vpack.c.b16 %v125, %v124
    %v138 = vpack.c.b16 %v127, %v126
    %v139 = vpack.c.b16 %v129, %v128
    %v140 = vpack.c.b16 %v131, %v130
    %v141 = vpack.c.b16 %v133, %v132
    %150 = vmatprep.subr.bf16.mxu0 0
    %151 = vmatpush1.bf16.msra.mxu0 %v134
    %152 = vmatprep.subr.bf16.mxu0 0
    %153 = vmatpush1.bf16.msra.mxu0 %v135
    %154 = vmatprep.subr.bf16.mxu0 0
    %155 = vmatpush1.bf16.msra.mxu0 %v136
    %156 = vmatprep.subr.bf16.mxu0 0
    %157 = vmatpush1.bf16.msra.mxu0 %v137
    %158 = vmatprep.subr.bf16.mxu0 0
    %159 = vmatpush1.bf16.msra.mxu0 %v138
    %160 = vmatprep.subr.bf16.mxu0 0
    %161 = vmatpush1.bf16.msra.mxu0 %v139
    %162 = vmatprep.subr.bf16.mxu0 0
    %163 = vmatpush1.bf16.msra.mxu0 %v140
    %164 = vmatprep.subr.bf16.mxu0 0
    %165 = vmatpush1.bf16.msra.mxu0 %v141
    %166 = vmatprep.subr.bf16.mxu0 0
    %167 = vmatpush1.bf16.msra.mxu0 0
    %168 = vmatprep.subr.bf16.mxu0 0
    %169 = vmatpush1.bf16.msra.mxu0 0
    %170 = vmatprep.subr.bf16.mxu0 0
    %171 = vmatpush1.bf16.msra.mxu0 0
    %172 = vmatprep.subr.bf16.mxu0 0
    %173 = vmatpush1.bf16.msra.mxu0 0
    %174 = vmatprep.subr.bf16.mxu0 0
    %175 = vmatpush1.bf16.msra.mxu0 0
    %176 = vmatprep.subr.bf16.mxu0 0
    %177 = vmatpush1.bf16.msra.mxu0 0
    %178 = vmatprep.subr.bf16.mxu0 0
    %179 = vmatpush1.bf16.msra.mxu0 0
    %180 = vmatprep.subr.bf16.mxu0 0
    %181 = vmatpush1.bf16.msra.mxu0 0
    %182 = vmatprep.mubr.bf16.mxu0 0
    %183 = vmatmul.mubr.bf16.gmra.mrb[0].mxu0 %v100
    %v184 = vpop.f32.mrb[0].mxu0
    %v185 = vadd.f32 0.0, %v184
    %v186 = vpop.f32.mrb[0].mxu0
    %v187 = vpop.f32.mrb[0].mxu0
    %v188 = vadd.f32 0.0, %v187
    %v189 = vpop.f32.mrb[0].mxu0
    %190 = vdwg.mxu0
    %v191 = vadd.f32 %v76, %v185
    %v192 = vadd.f32 %v77, %v188
    %193 = vst [vmem:[#allocation2] sm:$0xff] %v191
    %194 = vst [vmem:[#allocation2 + $0x8] sm:$0xff] %v192
    // Predicated region
    $region38: #{tpu_custom_call.1} parent=1 // pred_check
      %p195 = pneg %p63
    $region39: #{tpu_custom_call.1} parent=1 // pred_check_branch
      %197 = sbr.rel (%p195) target = $region41
    $region40: #{tpu_custom_call.1} parent=1 // pred_region
      %v198 = vld [vmem:[%s3] sm:$0xf]
      %v199 = vld [vmem:[%s3 + $0x4] sm:$0xf]
      %v200 = vld [vmem:[#allocation8] sm:$0xf]
      %v201 = vld [vmem:[#allocation8 + $0x4] sm:$0xf]
      %v202 = vld [vmem:[#allocation8 + $0x8] sm:$0xf]
      %v203 = vld [vmem:[#allocation8 + $0xc] sm:$0xf]
      %v204 = vld [vmem:[#allocation8 + $0x10] sm:$0xf]
      %v205 = vld [vmem:[#allocation8 + $0x14] sm:$0xf]
      %v206 = vld [vmem:[#allocation8 + $0x18] sm:$0xf]
      %v207 = vld [vmem:[#allocation8 + $0x1c] sm:$0xf]
      %v208 = vld [vmem:[#allocation8 + $0x20] sm:$0xf]
      %v209 = vld [vmem:[#allocation8 + $0x24] sm:$0xf]
      %v210 = vld [vmem:[#allocation8 + $0x28] sm:$0xf]
      %v211 = vld [vmem:[#allocation8 + $0x2c] sm:$0xf]
      %v212 = vld [vmem:[#allocation8 + $0x30] sm:$0xf]
      %v213 = vld [vmem:[#allocation8 + $0x34] sm:$0xf]
      %v214 = vld [vmem:[#allocation8 + $0x38] sm:$0xf]
      %v215 = vld [vmem:[#allocation8 + $0x3c] sm:$0xf]
      %v218 = vunpack.c.l.b16 %v198
      %v219 = vunpack.c.l.b16 %v199
      %v220 = vpack.c.b16 %v219, %v218
      %v238 = vunpack.c.l.b16 %v200
      %v239 = vunpack.c.l.b16 %v201
      %v240 = vunpack.c.l.b16 %v202
      %v241 = vunpack.c.l.b16 %v203
      %v242 = vunpack.c.l.b16 %v204
      %v243 = vunpack.c.l.b16 %v205
      %v244 = vunpack.c.l.b16 %v206
      %v245 = vunpack.c.l.b16 %v207
      %v246 = vunpack.c.l.b16 %v208
      %v247 = vunpack.c.l.b16 %v209
      %v248 = vunpack.c.l.b16 %v210
      %v249 = vunpack.c.l.b16 %v211
      %v250 = vunpack.c.l.b16 %v212
      %v251 = vunpack.c.l.b16 %v213
      %v252 = vunpack.c.l.b16 %v214
      %v253 = vunpack.c.l.b16 %v215
      %v254 = vpack.c.b16 %v239, %v238
      %v255 = vpack.c.b16 %v241, %v240
      %v256 = vpack.c.b16 %v243, %v242
      %v257 = vpack.c.b16 %v245, %v244
      %v258 = vpack.c.b16 %v247, %v246
      %v259 = vpack.c.b16 %v249, %v248
      %v260 = vpack.c.b16 %v251, %v250
      %v261 = vpack.c.b16 %v253, %v252
      %270 = vmatprep.subr.bf16.mxu0 0
      %271 = vmatpush1.bf16.msra.mxu0 %v254
      %272 = vmatprep.subr.bf16.mxu0 0
      %273 = vmatpush1.bf16.msra.mxu0 %v255
      %274 = vmatprep.subr.bf16.mxu0 0
      %275 = vmatpush1.bf16.msra.mxu0 %v256
      %276 = vmatprep.subr.bf16.mxu0 0
      %277 = vmatpush1.bf16.msra.mxu0 %v257
      %278 = vmatprep.subr.bf16.mxu0 0
      %279 = vmatpush1.bf16.msra.mxu0 %v258
      %280 = vmatprep.subr.bf16.mxu0 0
      %281 = vmatpush1.bf16.msra.mxu0 %v259
      %282 = vmatprep.subr.bf16.mxu0 0
      %283 = vmatpush1.bf16.msra.mxu0 %v260
      %284 = vmatprep.subr.bf16.mxu0 0
      %285 = vmatpush1.bf16.msra.mxu0 %v261
      %286 = vmatprep.subr.bf16.mxu0 0
      %287 = vmatpush1.bf16.msra.mxu0 0
      %288 = vmatprep.subr.bf16.mxu0 0
      %289 = vmatpush1.bf16.msra.mxu0 0
      %290 = vmatprep.subr.bf16.mxu0 0
      %291 = vmatpush1.bf16.msra.mxu0 0
      %292 = vmatprep.subr.bf16.mxu0 0
      %293 = vmatpush1.bf16.msra.mxu0 0
      %294 = vmatprep.subr.bf16.mxu0 0
      %295 = vmatpush1.bf16.msra.mxu0 0
      %296 = vmatprep.subr.bf16.mxu0 0
      %297 = vmatpush1.bf16.msra.mxu0 0
      %298 = vmatprep.subr.bf16.mxu0 0
      %299 = vmatpush1.bf16.msra.mxu0 0
      %300 = vmatprep.subr.bf16.mxu0 0
      %301 = vmatpush1.bf16.msra.mxu0 0
      %302 = vmatprep.mubr.bf16.mxu0 0
      %303 = vmatmul.mubr.bf16.gmra.mrb[0].mxu0 %v220
      %v304 = vpop.f32.mrb[0].mxu0
      %v305 = vadd.f32 0.0, %v304
      %v306 = vpop.f32.mrb[0].mxu0
      %v307 = vpop.f32.mrb[0].mxu0
      %v308 = vadd.f32 0.0, %v307
      %v309 = vpop.f32.mrb[0].mxu0
      %310 = vdwg.mxu0
      %v311 = vld [vmem:[#allocation2] sm:$0xff]
      %v312 = vld [vmem:[#allocation2 + $0x8] sm:$0xff]
      %v313 = vadd.f32 %v311, %v305
      %v314 = vadd.f32 %v312, %v308
      %v315 = vpack.c.bf16 %v314, %v313
      %v317 = vunpack.c.l.b16 %v315
      %v318 = vunpack.c.h.b16 %v315
      %v319 = vpack.c.b16 %v317, %v317
      %v320 = vpack.c.b16 %v318, %v318
      %323 = vst [vmem:[#allocation9] sm:$0xf] %v319
      %324 = vst [vmem:[#allocation9 + $0x4] sm:$0xf] %v320
    $region41: #{tpu_custom_call.1} parent=1 // pred_fallthru
      _
    // Predicated region
    $region42: #{tpu_custom_call.1} parent=1 // pred_check
      _
    $region43: #{tpu_custom_call.1} parent=1 // pred_check_branch
      %326 = sbr.rel (0) target = $region45
    $region44: #{tpu_custom_call.1} parent=1 // pred_region
      %s328 = ssub.s32 128, 128
      %329 = vsyncadd [#allocation5], %s328
      %s330 = sshll.u32 [#allocation9], 4
      %s331 = int_to_ptr.vmem [resolvable:$true] %s330
      %336 = dma.vmem_to_hbm [thread:$0]  %s331, 128, %s5, [#allocation5], 64, 64, 4
    $region45: #{tpu_custom_call.1} parent=1 // pred_fallthru
      _
    // Predicated region
    $region46: #{tpu_custom_call.1} parent=1 // pred_check
      _
    $region47: #{tpu_custom_call.1} parent=1 // pred_check_branch
      %338 = sbr.rel (0) target = $region49
    $region48: #{tpu_custom_call.1} parent=1 // pred_region
      %339 = dma.done [#allocation5], 128
    $region49: #{tpu_custom_call.1} parent=1 // pred_fallthru
      _
    %340 = vsyncpa [#allocation4], 1
    %341 = vsyncpa [#allocation7], 1
    %342 = vsyncpa [#allocation5], 1

</llo_original>
